<compile_context>
chip_gen: v7x
topology: tpu7x:2x2x1
jax: 0.10.0
libtpu: 0.0.40
codegen_flags: <defaults>
</compile_context>

<pallas_src>
import math

import jax
import jax.numpy as jnp
from jax.experimental import pallas as pl
from jax.experimental.pallas import tpu as pltpu


def _nlinear_kernel(x_ref, w_ref, b_ref, o_ref):
    # x_ref: (TB, d_in), w_ref: (d_in, d_out), b_ref: (1, d_out), o_ref: (TB, d_out)
    acc = jnp.dot(
        x_ref[...],
        w_ref[...],
        preferred_element_type=jnp.float32,
        precision=jax.lax.Precision.HIGHEST,
    )
    o_ref[...] = (acc + b_ref[...].astype(jnp.float32)).astype(o_ref.dtype)


def _pick_tb(batch, d_in, d_out, itemsize, budget_bytes):
    """Largest batch-tile that (a) keeps x+out tiles ~budget and (b) is layout-legal
    (== B, or a multiple of 8 that divides B)."""
    per_row = (d_in + d_out) * itemsize
    target = max(1, budget_bytes // max(per_row, 1))
    if batch <= target:
        return batch
    t = (target // 8) * 8
    while t >= 8:
        if batch % t == 0:
            return t
        t -= 8
    return batch  # fallback: full batch per step (always correct)


def nlinear(x, weight, bias=None, *, tile_budget_bytes=2 * 1024 * 1024):
    B, N, d_in = x.shape
    n_w, d_in_w, d_out = weight.shape
    assert (n_w, d_in_w) == (N, d_in), "weight must have shape (n, d_in, d_out)"
    if bias is None:
        bias = jnp.zeros((N, d_out), dtype=x.dtype)
    assert bias.shape == (N, d_out)

    # Layout plumbing in the wrapper: feature axis leading, batch rows on the sublane
    # axis, d_in / d_out on the lane axis.
    x_t = jnp.swapaxes(x, 0, 1)          # (N, B, d_in)
    bias3 = bias[:, None, :]             # (N, 1, d_out)

    itemsize = jnp.dtype(x.dtype).itemsize
    TB = _pick_tb(B, d_in, d_out, itemsize, tile_budget_bytes)
    assert B % TB == 0

    out_t = pl.pallas_call(
        _nlinear_kernel,
        out_shape=jax.ShapeDtypeStruct((N, B, d_out), x.dtype),
        grid_spec=pltpu.PrefetchScalarGridSpec(
            num_scalar_prefetch=0,
            grid=(N, B // TB),            # inner axis = batch tiles -> weight stays resident
            in_specs=[
                pl.BlockSpec((None, TB, d_in), lambda n, i: (n, i, 0)),      # x_t
                pl.BlockSpec((None, d_in, d_out), lambda n, i: (n, 0, 0)),   # weight
                pl.BlockSpec((None, 1, d_out), lambda n, i: (n, 0, 0)),      # bias
            ],
            out_specs=pl.BlockSpec((None, TB, d_out), lambda n, i: (n, i, 0)),
        ),
        compiler_params=pltpu.CompilerParams(
            dimension_semantics=("parallel", "parallel"),
        ),
    )(x_t, weight, bias3)

    return jnp.swapaxes(out_t, 0, 1)     # (B, N, d_out)


if __name__ == "__main__":
    key = jax.random.PRNGKey(0)
    B, N, D_IN, D_OUT = 8, 4, 16, 32     # batch, n_features, d_in, d_out (small demo)

    kx, kw, kb = jax.random.split(key, 3)
    x = jax.random.normal(kx, (B, N, D_IN), dtype=jnp.float32)

    # Parameters initialized like nn.Linear (uniform in +-1/sqrt(d_in)), deterministic.
    bound = 1.0 / math.sqrt(D_IN)
    weight = jax.random.uniform(kw, (N, D_IN, D_OUT), jnp.float32, -bound, bound)
    bias = jax.random.uniform(kb, (N, D_OUT), jnp.float32, -bound, bound)

    out = nlinear(x, weight, bias)
    jax.block_until_ready(out)

    # Pure-JAX reference mirroring the PyTorch forward exactly:
    #   x = (x[..., None] * weight[None]).sum(-2) + bias[None]
    ref = (x[..., None] * weight[None]).sum(-2) + bias[None]

    assert out.shape == (B, N, D_OUT)
    assert jnp.allclose(out, ref, atol=1e-3, rtol=1e-3), "mismatch vs reference"
    print("KERNEL_OK")
</pallas_src>

<mosaic_0001>
module attributes {stable_mosaic.version = 11 : i64} {
  func.func @_nlinear_kernel(%arg0: i32, %arg1: i32, %arg2: memref<1x8x16xf32, #tpu.memory_space<vmem>>, %arg3: memref<1x16x32xf32, #tpu.memory_space<vmem>>, %arg4: memref<1x1x32xf32, #tpu.memory_space<vmem>>, %arg5: memref<1x8x32xf32, #tpu.memory_space<vmem>>) attributes {dimension_semantics = [#tpu.dimension_semantics<parallel>, #tpu.dimension_semantics<parallel>], iteration_bounds = array<i64: 4, 1>, scalar_prefetch = 0 : i64, scratch_operands = 0 : i64, tpu.core_type = #tpu.core_type<tc>, window_params = [{transform_indices = @transform_0, window_bounds = array<i64: 1, 8, 16>}, {transform_indices = @transform_1, window_bounds = array<i64: 1, 16, 32>}, {transform_indices = @transform_2, window_bounds = array<i64: 1, 1, 32>}, {transform_indices = @transform_3, window_bounds = array<i64: 1, 8, 32>}]} {
    %c0 = arith.constant 0 : index
    %c0_0 = arith.constant 0 : index
    %c0_1 = arith.constant 0 : index
    %0 = vector.load %arg2[%c0, %c0_0, %c0_1] : memref<1x8x16xf32, #tpu.memory_space<vmem>>, vector<1x8x16xf32>
    %1 = vector.shape_cast %0 : vector<1x8x16xf32> to vector<8x16xf32>
    %c0_2 = arith.constant 0 : index
    %c0_3 = arith.constant 0 : index
    %c0_4 = arith.constant 0 : index
    %2 = vector.load %arg3[%c0_2, %c0_3, %c0_4] : memref<1x16x32xf32, #tpu.memory_space<vmem>>, vector<1x16x32xf32>
    %3 = vector.shape_cast %2 : vector<1x16x32xf32> to vector<16x32xf32>
    %cst = arith.constant dense<0.000000e+00> : vector<8x32xf32>
    %4 = tpu.matmul %1, %3, %cst {dimension_numbers = #tpu.dot_dimension_numbers<[1], [0], [0], [1], [0, 0, 1, 1], [], []>, precision = #tpu.contract_precision<fp32>} : vector<8x16xf32>, vector<16x32xf32>, vector<8x32xf32> -> vector<8x32xf32>
    %c0_5 = arith.constant 0 : index
    %c0_6 = arith.constant 0 : index
    %c0_7 = arith.constant 0 : index
    %5 = vector.load %arg4[%c0_5, %c0_6, %c0_7] : memref<1x1x32xf32, #tpu.memory_space<vmem>>, vector<1x1x32xf32>
    %6 = vector.shape_cast %5 : vector<1x1x32xf32> to vector<1x32xf32>
    %7 = vector.broadcast %6 : vector<1x32xf32> to vector<8x32xf32>
    %8 = arith.addf %4, %7 : vector<8x32xf32>
    %c0_8 = arith.constant 0 : index
    %c0_9 = arith.constant 0 : index
    %c0_10 = arith.constant 0 : index
    %9 = vector.load %arg5[%c0_8, %c0_9, %c0_10] : memref<1x8x32xf32, #tpu.memory_space<vmem>>, vector<1x8x32xf32>
    %10 = vector.shape_cast %9 : vector<1x8x32xf32> to vector<8x32xf32>
    %11 = vector.shape_cast %8 : vector<8x32xf32> to vector<1x8x32xf32>
    tpu.vector_store %arg5[%c0_8, %c0_9, %c0_10], %11 {strides = array<i32>} : memref<1x8x32xf32, #tpu.memory_space<vmem>>, vector<1x8x32xf32>,
    return
  }
  func.func @transform_0(%arg0: i32, %arg1: i32) -> (i32, i32, i32) {
    %c0_i32 = arith.constant 0 : i32
    %c0_i32_0 = arith.constant 0 : i32
    return %arg0, %arg1, %c0_i32 : i32, i32, i32
  }
  func.func @transform_1(%arg0: i32, %arg1: i32) -> (i32, i32, i32) {
    %c0_i32 = arith.constant 0 : i32
    %c0_i32_0 = arith.constant 0 : i32
    %c0_i32_1 = arith.constant 0 : i32
    return %arg0, %c0_i32, %c0_i32_0 : i32, i32, i32
  }
  func.func @transform_2(%arg0: i32, %arg1: i32) -> (i32, i32, i32) {
    %c0_i32 = arith.constant 0 : i32
    %c0_i32_0 = arith.constant 0 : i32
    %c0_i32_1 = arith.constant 0 : i32
    return %arg0, %c0_i32, %c0_i32_0 : i32, i32, i32
  }
  func.func @transform_3(%arg0: i32, %arg1: i32) -> (i32, i32, i32) {
    %c0_i32 = arith.constant 0 : i32
    %c0_i32_0 = arith.constant 0 : i32
    return %arg0, %arg1, %c0_i32 : i32, i32, i32
  }
}

</mosaic_0001>

<llo_original>
// kernel: tpu_custom_call.1
$region0: #{tpu_custom_call.1}
  #allocation0 [shape = 'u32[]', space=smem, size = 0x4, offset = 0x4, fixed_abs, tag = 'smem constant byte address 0x4 - core index']
  #allocation1 [shape = 'u32[144,128]{1,0:T(1,128)}', space=vmem, size = 0x12000, scoped, tag = 'internal scratch']
  %s0 = inlined_call_operand.hbm [shape: f32[4,8,16], index: 0, kind: input, shape index: {}]
  %s1 = inlined_call_operand.hbm [shape: f32[4,16,32], index: 1, kind: input, shape index: {}]
  %s2 = inlined_call_operand.vmem [shape: f32[4,1,32], index: 2, kind: input, shape index: {}]
  %s3 = inlined_call_operand.hbm [shape: f32[4,8,32], index: 3, kind: output, shape index: {}]
  %s4 = sld [smem:[#allocation0]]
  $region53: #{tpu_custom_call.1} parent=0
    _
  %s6 = ssub.s32 1, %s4
  %s7 = scalar_select 0, %s6, %s4
  $region1: #{tpu_custom_call.1} parent=0
    #allocation2 [shape = 'u8[8192]{0}', space=vmem, size = 0x2000, scoped, tag = 'input window, operand 0']
    #allocation3 [shape = 's32[2]{0}', space=sflag, size = 0x8, scoped, tag = 'scoped memory for tpu_custom_call.1']
    #allocation4 [shape = 's32[2]{0}', space=sflag, size = 0x8, scoped, tag = 'scoped memory for tpu_custom_call.1']
    #allocation5 [shape = 'u8[16384]{0}', space=vmem, size = 0x4000, scoped, tag = 'input window, operand 1']
    #allocation6 [shape = 's32[2]{0}', space=sflag, size = 0x8, scoped, tag = 'scoped memory for tpu_custom_call.1']
    #allocation7 [shape = 'u8[8192]{0}', space=vmem, size = 0x2000, scoped, tag = 'output window, operand 0']
    %8 = vsyncpa [#allocation3], 0
    %s9 = scalar_lea.sflag [#allocation3], 1
    %10 = vsyncpa %s9, 0
    %11 = vsyncpa [#allocation6], 0
    %s12 = scalar_lea.sflag [#allocation6], 1
    %13 = vsyncpa %s12, 0
    %14 = vsyncpa [#allocation4], 0
    %s15 = scalar_lea.sflag [#allocation4], 1
    %16 = vsyncpa %s15, 0
    loop: start=0, step=1, limit=6
    $region2: #{tpu_custom_call.1} parent=1 // loop_pre_header
      _
    $region3: #{tpu_custom_call.1} parent=1 // loop_header
      %s18 = sphi 0, %s22
      %p19 = scmp.ge.s32.totalorder %s18, 6
      %s25 = sphi 0, %s37
      %s26 = sphi 0, %s33
      %s27 = sphi 0, %s25
      %s28 = sphi 0, %s26
      %s29 = sphi 0, %s27
      %s30 = sphi 0, %s28
      %s42 = sphi 0, %s44
      %s45 = sphi 0, %s42
      %s46 = sphi 0, %s45
      %s62 = sphi 0, %s46
      %s68 = sphi 0, %s70
      %s71 = sphi 0, %s68
      %s72 = sphi 0, %s71
      %s88 = sphi 0, %s72
      %s94 = sphi 0, %s96
      %s97 = sphi 0, %s94
      %s98 = sphi 0, %s97
      %s114 = sphi 0, %s98
      %s122 = sphi 0, %s124
      %s125 = sphi 0, %s122
      %s126 = sphi 0, %s125
      %s142 = sphi 0, %s126
    $region4: #{tpu_custom_call.1} parent=1 // loop_header_branch
      %21 = sbr.rel (%p19) target = $region8
    $region5: #{tpu_custom_call.1} parent=1 // loop_body
      %s23 = ssub.s32 %s18, 1
      %s24 = ssub.s32 %s18, 2
      %s31 = sadd.s32 1, %s26
      %p32 = scmp.ge.s32.totalorder %s31, 1
      %s33 = scalar_select %p32, 0, %s31
      %s34 = sadd.s32 1, %s25
      %s35 = scalar_select %p32, %s34, %s25
      %p36 = scmp.ge.s32.totalorder %s35, 4
      %s37 = scalar_select %p36, 0, %s35
      %s38 = ssub.s32 %s25, %s37
      %s39 = ssub.s32 %s26, %s33
      %s40 = sor.u32 %s38, %s39
      %p41 = scmp.eq.s32.totalorder %s40, 0
      %s43 = sadd.s32 %s42, 1
      %s44 = scalar_select %p41, %s42, %s43
      %p47 = pneg %p41
      %p48 = scmp.eq.s32.totalorder %s18, 3
      %p49 = por %p47, %p48
      %p50 = scmp.ne.s32.totalorder %s42, %s45
      %p51 = scmp.eq.s32.totalorder %s18, 0
      %p52 = por %p50, %p51
      %p53 = scmp.ne.s32.totalorder %s42, %s45
      %p54 = scmp.eq.s32.totalorder %s23, 3
      %p55 = por %p53, %p54
      %p56 = scmp.ne.s32.totalorder %s45, %s46
      %p57 = scmp.eq.s32.totalorder %s23, 0
      %p58 = por %p56, %p57
      %p59 = scmp.ne.s32.totalorder %s45, %s46
      %p60 = scmp.eq.s32.totalorder %s24, 3
      %p61 = por %p59, %p60
      %p63 = scmp.ne.s32.totalorder %s46, %s62
      %p64 = scmp.eq.s32.totalorder %s24, 0
      %p65 = por %p63, %p64
      %s66 = ssub.s32 %s25, %s37
      %p67 = scmp.eq.s32.totalorder %s66, 0
      %s69 = sadd.s32 %s68, 1
      %s70 = scalar_select %p67, %s68, %s69
      %p73 = pneg %p67
      %p74 = scmp.eq.s32.totalorder %s18, 3
      %p75 = por %p73, %p74
      %p76 = scmp.ne.s32.totalorder %s68, %s71
      %p77 = scmp.eq.s32.totalorder %s18, 0
      %p78 = por %p76, %p77
      %p79 = scmp.ne.s32.totalorder %s68, %s71
      %p80 = scmp.eq.s32.totalorder %s23, 3
      %p81 = por %p79, %p80
      %p82 = scmp.ne.s32.totalorder %s71, %s72
      %p83 = scmp.eq.s32.totalorder %s23, 0
      %p84 = por %p82, %p83
      %p85 = scmp.ne.s32.totalorder %s71, %s72
      %p86 = scmp.eq.s32.totalorder %s24, 3
      %p87 = por %p85, %p86
      %p89 = scmp.ne.s32.totalorder %s72, %s88
      %p90 = scmp.eq.s32.totalorder %s24, 0
      %p91 = por %p89, %p90
      %s92 = ssub.s32 %s25, %s37
      %p93 = scmp.eq.s32.totalorder %s92, 0
      %s95 = sadd.s32 %s94, 1
      %s96 = scalar_select %p93, %s94, %s95
      %p99 = pneg %p93
      %p100 = scmp.eq.s32.totalorder %s18, 3
      %p101 = por %p99, %p100
      %p102 = scmp.ne.s32.totalorder %s94, %s97
      %p103 = scmp.eq.s32.totalorder %s18, 0
      %p104 = por %p102, %p103
      %p105 = scmp.ne.s32.totalorder %s94, %s97
      %p106 = scmp.eq.s32.totalorder %s23, 3
      %p107 = por %p105, %p106
      %p108 = scmp.ne.s32.totalorder %s97, %s98
      %p109 = scmp.eq.s32.totalorder %s23, 0
      %p110 = por %p108, %p109
      %p111 = scmp.ne.s32.totalorder %s97, %s98
      %p112 = scmp.eq.s32.totalorder %s24, 3
      %p113 = por %p111, %p112
      %p115 = scmp.ne.s32.totalorder %s98, %s114
      %p116 = scmp.eq.s32.totalorder %s24, 0
      %p117 = por %p115, %p116
      %s118 = ssub.s32 %s25, %s37
      %s119 = ssub.s32 %s26, %s33
      %s120 = sor.u32 %s118, %s119
      %p121 = scmp.eq.s32.totalorder %s120, 0
      %s123 = sadd.s32 %s122, 1
      %s124 = scalar_select %p121, %s122, %s123
      %p127 = pneg %p121
      %p128 = scmp.eq.s32.totalorder %s18, 3
      %p129 = por %p127, %p128
      %p130 = scmp.ne.s32.totalorder %s122, %s125
      %p131 = scmp.eq.s32.totalorder %s18, 0
      %p132 = por %p130, %p131
      %p133 = scmp.ne.s32.totalorder %s122, %s125
      %p134 = scmp.eq.s32.totalorder %s23, 3
      %p135 = por %p133, %p134
      %p136 = scmp.ne.s32.totalorder %s125, %s126
      %p137 = scmp.eq.s32.totalorder %s23, 0
      %p138 = por %p136, %p137
      %p139 = scmp.ne.s32.totalorder %s125, %s126
      %p140 = scmp.eq.s32.totalorder %s24, 3
      %p141 = por %p139, %p140
      %p143 = scmp.ne.s32.totalorder %s126, %s142
      %p144 = scmp.eq.s32.totalorder %s24, 0
      %p145 = por %p143, %p144
      %p146 = scmp.le.s32.totalorder 1, %s18
      %p147 = scmp.lt.s32.totalorder %s18, 5
      %p148 = pnand %p146, %p147
      %p149 = pneg %p148
      // Predicated region
      $region9: #{tpu_custom_call.1} parent=5 // pred_check
        _
      $region10: #{tpu_custom_call.1} parent=5 // pred_check_branch
        %151 = sbr.rel (%p148) target = $region12
      $region11: #{tpu_custom_call.1} parent=5 // pred_region
        %s152 = ssub.s32 %s18, 1
      $region12: #{tpu_custom_call.1} parent=5 // pred_fallthru
        _
      %p153 = scmp.lt.s32.totalorder %s18, 4
      // Predicated region
      $region13: #{tpu_custom_call.1} parent=5 // pred_check
        %p154 = pneg %p153
      $region14: #{tpu_custom_call.1} parent=5 // pred_check_branch
        %156 = sbr.rel (%p154) target = $region16
      $region15: #{tpu_custom_call.1} parent=5 // pred_region
        // Predicated region
        $region17: #{tpu_custom_call.1} parent=15 // pred_check
          %p157 = pneg %p52
        $region18: #{tpu_custom_call.1} parent=15 // pred_check_branch
          %159 = sbr.rel (%p157) target = $region20
        $region19: #{tpu_custom_call.1} parent=15 // pred_region
          %s160 = sand.u32 %s42, 1
          %s161 = scalar_lea.sflag [#allocation3], %s160
          %s162 = sand.u32 %s42, 1
          %s163 = smul.addr %s162, 8
          %s164 = scalar_lea.vmem [#allocation2], %s163
          %s166 = ssub.s32 128, 128
          %167 = vsyncadd %s161, %s166
          %s168 = sadd.s32 %s26, %s25
          %s169 = smul.addr %s168, 128
          %s170 = scalar_lea.hbm %s0, %s169
          %s172 = sshll.u32 %s164, 4
          %s173 = int_to_ptr.vmem [resolvable:$true] %s172
          %175 = dma.hbm_to_vmem [thread:$0]  %s170, 128, %s173, %s161
        $region20: #{tpu_custom_call.1} parent=15 // pred_fallthru
          _
        // Predicated region
        $region21: #{tpu_custom_call.1} parent=15 // pred_check
          %p176 = pneg %p78
        $region22: #{tpu_custom_call.1} parent=15 // pred_check_branch
          %178 = sbr.rel (%p176) target = $region24
        $region23: #{tpu_custom_call.1} parent=15 // pred_region
          %s179 = sand.u32 %s68, 1
          %s180 = scalar_lea.sflag [#allocation6], %s179
          %s181 = sand.u32 %s68, 1
          %s182 = smul.addr %s181, 16
          %s183 = scalar_lea.vmem [#allocation5], %s182
          %s185 = ssub.s32 256, 256
          %186 = vsyncadd %s180, %s185
          %s187 = smul.addr %s25, 2
          %s188 = smul.addr %s187, 128
          %s189 = scalar_lea.hbm %s1, %s188
          %s190 = sshll.u32 %s183, 4
          %s191 = int_to_ptr.vmem [resolvable:$true] %s190
          %196 = dma.hbm_to_vmem [thread:$0]  %s189, 256, %s191, %s180, 128, 128, 8
        $region24: #{tpu_custom_call.1} parent=15 // pred_fallthru
          _
        // Predicated region
        $region25: #{tpu_custom_call.1} parent=15 // pred_check
          %p197 = pneg %p104
        $region26: #{tpu_custom_call.1} parent=15 // pred_check_branch
          %199 = sbr.rel (%p197) target = $region28
        $region27: #{tpu_custom_call.1} parent=15 // pred_region
          %p200 = scmp.lt.s32.totalorder %s25, 3
          %s201 = scalar_select %p200, %s25, 3
          %s202 = scalar_lea.vmem %s2, %s201
        $region28: #{tpu_custom_call.1} parent=15 // pred_fallthru
          _
      $region16: #{tpu_custom_call.1} parent=5 // pred_fallthru
        _
      %p203 = scmp.le.s32.totalorder 1, %s18
      %p204 = scmp.lt.s32.totalorder %s18, 5
      %p205 = pnand %p203, %p204
      %p206 = pneg %p205
      // Predicated region
      $region29: #{tpu_custom_call.1} parent=5 // pred_check
        _
      $region30: #{tpu_custom_call.1} parent=5 // pred_check_branch
        %208 = sbr.rel (%p205) target = $region32
      $region31: #{tpu_custom_call.1} parent=5 // pred_region
        %s209 = ssub.s32 %s18, 1
        %s210 = sand.u32 %s45, 1
        %s211 = scalar_lea.sflag [#allocation3], %s210
        %s212 = sand.u32 %s45, 1
        %s213 = smul.addr %s212, 8
        %s214 = scalar_lea.vmem [#allocation2], %s213
        // Predicated region
        $region33: #{tpu_custom_call.1} parent=31 // pred_check
          %p215 = pneg %p58
        $region34: #{tpu_custom_call.1} parent=31 // pred_check_branch
          %217 = sbr.rel (%p215) target = $region36
        $region35: #{tpu_custom_call.1} parent=31 // pred_region
          %218 = dma.done %s211, 128
        $region36: #{tpu_custom_call.1} parent=31 // pred_fallthru
          _
        %s219 = sand.u32 %s71, 1
        %s220 = scalar_lea.sflag [#allocation6], %s219
        %s221 = sand.u32 %s71, 1
        %s222 = smul.addr %s221, 16
        %s223 = scalar_lea.vmem [#allocation5], %s222
        // Predicated region
        $region37: #{tpu_custom_call.1} parent=31 // pred_check
          %p224 = pneg %p84
        $region38: #{tpu_custom_call.1} parent=31 // pred_check_branch
          %226 = sbr.rel (%p224) target = $region40
        $region39: #{tpu_custom_call.1} parent=31 // pred_region
          %227 = dma.done %s220, 256
        $region40: #{tpu_custom_call.1} parent=31 // pred_fallthru
          _
        %s228 = sand.u32 %s45, 1
        %s229 = scalar_lea.sflag [#allocation3], %s228
        %s230 = sand.u32 %s45, 1
        %s231 = smul.addr %s230, 8
        %s232 = scalar_lea.vmem [#allocation2], %s231
        %p233 = pneg %p58
        %p234 = pneg %p55
        %s235 = sand.u32 %s71, 1
        %s236 = scalar_lea.sflag [#allocation6], %s235
        %s237 = sand.u32 %s71, 1
        %s238 = smul.addr %s237, 16
        %s239 = scalar_lea.vmem [#allocation5], %s238
        %p240 = pneg %p84
        %p241 = pneg %p81
        %p242 = scmp.lt.s32.totalorder %s27, 3
        %s243 = scalar_select %p242, %s27, 3
        %s244 = scalar_lea.vmem %s2, %s243
        %p245 = pneg %p110
        %p246 = pneg %p107
        %p247 = pneg %p138
        %p248 = pneg %p135
        %s249 = sand.u32 %s125, 1
        %s250 = scalar_lea.sflag [#allocation4], %s249
        %s251 = sand.u32 %s125, 1
        %s252 = smul.addr %s251, 8
        %s253 = scalar_lea.vmem [#allocation7], %s252
        %p254 = scmp.lt.s32.totalorder %s27, 3
        %s255 = scalar_select %p254, %s27, 3
        %s256 = scalar_lea.vmem %s2, %s255
        %v257 = vld [vmem:[%s214] sm:$0xff]
        %v258 = vld [vmem:[%s223] sm:$0xff]
        %v259 = vld [vmem:[%s223 + $0x8] sm:$0xff]
        %v260 = vld [vmem:[%s256] sm:$0x1]
        %v262 = vlaneseq
        %v263 = vshrl.u32 %v262, 7
        %v264 = vsub.s32 0, %v263
        %v265 = vrot.slane %v260, %v264
        %vm267 = vcmask 130048
        %v269 = vsel %vm267, %v257, 0
        %271 = vmatprep.subr.mxu0 0.0
        %v272 = vand.u32 %v258, 4294901760
        %273 = vmatpush1.msra.mxu0 %v272
        %274 = vmatprep.subr.mxu0 0.0
        %v275 = vand.u32 %v259, 4294901760
        %276 = vmatpush1.msra.mxu0 %v275
        %277 = vmatprep.subr.mxu0 0.0
        %278 = vmatpush1.msra.mxu0 0.0
        %279 = vmatprep.subr.mxu0 0.0
        %280 = vmatpush1.msra.mxu0 0.0
        %281 = vmatprep.subr.mxu0 0.0
        %282 = vmatpush1.msra.mxu0 0.0
        %283 = vmatprep.subr.mxu0 0.0
        %284 = vmatpush1.msra.mxu0 0.0
        %285 = vmatprep.subr.mxu0 0.0
        %286 = vmatpush1.msra.mxu0 0.0
        %287 = vmatprep.subr.mxu0 0.0
        %288 = vmatpush1.msra.mxu0 0.0
        %289 = vmatprep.subr.mxu0 0.0
        %290 = vmatpush1.msra.mxu0 0.0
        %291 = vmatprep.subr.mxu0 0.0
        %292 = vmatpush1.msra.mxu0 0.0
        %293 = vmatprep.subr.mxu0 0.0
        %294 = vmatpush1.msra.mxu0 0.0
        %295 = vmatprep.subr.mxu0 0.0
        %296 = vmatpush1.msra.mxu0 0.0
        %297 = vmatprep.subr.mxu0 0.0
        %298 = vmatpush1.msra.mxu0 0.0
        %299 = vmatprep.subr.mxu0 0.0
        %300 = vmatpush1.msra.mxu0 0.0
        %301 = vmatprep.subr.mxu0 0.0
        %302 = vmatpush1.msra.mxu0 0.0
        %303 = vmatprep.subr.mxu0 0.0
        %304 = vmatpush1.msra.mxu0 0.0
        %305 = vmatprep.subr.mxu0 0.0
        %306 = vmatpush1.msra.mxu0 0.0
        %307 = vmatprep.subr.mxu0 0.0
        %308 = vmatpush1.msra.mxu0 0.0
        %309 = vmatprep.subr.mxu0 0.0
        %310 = vmatpush1.msra.mxu0 0.0
        %311 = vmatprep.subr.mxu0 0.0
        %312 = vmatpush1.msra.mxu0 0.0
        %313 = vmatprep.subr.mxu0 0.0
        %314 = vmatpush1.msra.mxu0 0.0
        %315 = vmatprep.subr.mxu0 0.0
        %316 = vmatpush1.msra.mxu0 0.0
        %317 = vmatprep.subr.mxu0 0.0
        %318 = vmatpush1.msra.mxu0 0.0
        %319 = vmatprep.subr.mxu0 0.0
        %320 = vmatpush1.msra.mxu0 0.0
        %321 = vmatprep.subr.mxu0 0.0
        %322 = vmatpush1.msra.mxu0 0.0
        %323 = vmatprep.subr.mxu0 0.0
        %324 = vmatpush1.msra.mxu0 0.0
        %325 = vmatprep.subr.mxu0 0.0
        %326 = vmatpush1.msra.mxu0 0.0
        %327 = vmatprep.subr.mxu0 0.0
        %328 = vmatpush1.msra.mxu0 0.0
        %329 = vmatprep.subr.mxu0 0.0
        %330 = vmatpush1.msra.mxu0 0.0
        %331 = vmatprep.subr.mxu0 0.0
        %332 = vmatpush1.msra.mxu0 0.0
        %333 = vmatprep.subr.mxu0 0.0
        %334 = vmatpush1.msra.mxu0 0.0
        %335 = vmatprep.subr.mxu0 0.0
        %336 = vmatpush1.msra.mxu0 0.0
        %337 = vmatprep.mubr.f32.mxu0 0.0
        %v338 = vand.u32 %v269, 4294901760
        %v339 = vsub.f32 %v269, %v338
        %v340 = vand.u32 %v339, 4294901760
        %v341 = vsub.f32 %v339, %v340
        %v342 = vand.u32 %v341, 4294901760
        %343 = vmatmul.mubr.f32.gmra.mrb[0].mxu0 %v342
        %v344 = vpop.f32.mrb[0].mxu0
        %v345 = vadd.f32 %v265, %v344
        %v346 = vpop.f32.mrb[0].mxu0
        %347 = vdwg.mxu0
        %348 = vmatprep.subr.mxu0 0.0
        %v349 = vand.u32 %v258, 4294901760
        %v350 = vsub.f32 %v258, %v349
        %v351 = vand.u32 %v350, 4294901760
        %v352 = vsub.f32 %v350, %v351
        %v353 = vand.u32 %v352, 4294901760
        %354 = vmatpush1.msra.mxu0 %v353
        %355 = vmatprep.subr.mxu0 0.0
        %v356 = vand.u32 %v259, 4294901760
        %v357 = vsub.f32 %v259, %v356
        %v358 = vand.u32 %v357, 4294901760
        %v359 = vsub.f32 %v357, %v358
        %v360 = vand.u32 %v359, 4294901760
        %361 = vmatpush1.msra.mxu0 %v360
        %362 = vmatprep.subr.mxu0 0.0
        %363 = vmatpush1.msra.mxu0 0.0
        %364 = vmatprep.subr.mxu0 0.0
        %365 = vmatpush1.msra.mxu0 0.0
        %366 = vmatprep.subr.mxu0 0.0
        %367 = vmatpush1.msra.mxu0 0.0
        %368 = vmatprep.subr.mxu0 0.0
        %369 = vmatpush1.msra.mxu0 0.0
        %370 = vmatprep.subr.mxu0 0.0
        %371 = vmatpush1.msra.mxu0 0.0
        %372 = vmatprep.subr.mxu0 0.0
        %373 = vmatpush1.msra.mxu0 0.0
        %374 = vmatprep.subr.mxu0 0.0
        %375 = vmatpush1.msra.mxu0 0.0
        %376 = vmatprep.subr.mxu0 0.0
        %377 = vmatpush1.msra.mxu0 0.0
        %378 = vmatprep.subr.mxu0 0.0
        %379 = vmatpush1.msra.mxu0 0.0
        %380 = vmatprep.subr.mxu0 0.0
        %381 = vmatpush1.msra.mxu0 0.0
        %382 = vmatprep.subr.mxu0 0.0
        %383 = vmatpush1.msra.mxu0 0.0
        %384 = vmatprep.subr.mxu0 0.0
        %385 = vmatpush1.msra.mxu0 0.0
        %386 = vmatprep.subr.mxu0 0.0
        %387 = vmatpush1.msra.mxu0 0.0
        %388 = vmatprep.subr.mxu0 0.0
        %389 = vmatpush1.msra.mxu0 0.0
        %390 = vmatprep.subr.mxu0 0.0
        %391 = vmatpush1.msra.mxu0 0.0
        %392 = vmatprep.subr.mxu0 0.0
        %393 = vmatpush1.msra.mxu0 0.0
        %394 = vmatprep.subr.mxu0 0.0
        %395 = vmatpush1.msra.mxu0 0.0
        %396 = vmatprep.subr.mxu0 0.0
        %397 = vmatpush1.msra.mxu0 0.0
        %398 = vmatprep.subr.mxu0 0.0
        %399 = vmatpush1.msra.mxu0 0.0
        %400 = vmatprep.subr.mxu0 0.0
        %401 = vmatpush1.msra.mxu0 0.0
        %402 = vmatprep.subr.mxu0 0.0
        %403 = vmatpush1.msra.mxu0 0.0
        %404 = vmatprep.subr.mxu0 0.0
        %405 = vmatpush1.msra.mxu0 0.0
        %406 = vmatprep.subr.mxu0 0.0
        %407 = vmatpush1.msra.mxu0 0.0
        %408 = vmatprep.subr.mxu0 0.0
        %409 = vmatpush1.msra.mxu0 0.0
        %410 = vmatprep.subr.mxu0 0.0
        %411 = vmatpush1.msra.mxu0 0.0
        %412 = vmatprep.subr.mxu0 0.0
        %413 = vmatpush1.msra.mxu0 0.0
        %414 = vmatprep.subr.mxu0 0.0
        %415 = vmatpush1.msra.mxu0 0.0
        %416 = vmatprep.subr.mxu0 0.0
        %417 = vmatpush1.msra.mxu0 0.0
        %418 = vmatprep.subr.mxu0 0.0
        %419 = vmatpush1.msra.mxu0 0.0
        %420 = vmatprep.subr.mxu0 0.0
        %421 = vmatpush1.msra.mxu0 0.0
        %422 = vmatprep.mubr.f32.mxu0 0.0
        %v423 = vand.u32 %v269, 4294901760
        %424 = vmatmul.mubr.f32.gmra.mrb[0].mxu0 %v423
        %v425 = vpop.f32.mrb[0].mxu0
        %v426 = vadd.f32 %v345, %v425
        %v427 = vpop.f32.mrb[0].mxu0
        %428 = vdwg.mxu0
        %429 = vmatprep.subr.mxu0 0.0
        %v430 = vand.u32 %v258, 4294901760
        %v431 = vsub.f32 %v258, %v430
        %432 = vmatpush1.msra.mxu0 %v431
        %433 = vmatprep.subr.mxu0 0.0
        %v434 = vand.u32 %v259, 4294901760
        %v435 = vsub.f32 %v259, %v434
        %436 = vmatpush1.msra.mxu0 %v435
        %437 = vmatprep.subr.mxu0 0.0
        %438 = vmatpush1.msra.mxu0 0.0
        %439 = vmatprep.subr.mxu0 0.0
        %440 = vmatpush1.msra.mxu0 0.0
        %441 = vmatprep.subr.mxu0 0.0
        %442 = vmatpush1.msra.mxu0 0.0
        %443 = vmatprep.subr.mxu0 0.0
        %444 = vmatpush1.msra.mxu0 0.0
        %445 = vmatprep.subr.mxu0 0.0
        %446 = vmatpush1.msra.mxu0 0.0
        %447 = vmatprep.subr.mxu0 0.0
        %448 = vmatpush1.msra.mxu0 0.0
        %449 = vmatprep.subr.mxu0 0.0
        %450 = vmatpush1.msra.mxu0 0.0
        %451 = vmatprep.subr.mxu0 0.0
        %452 = vmatpush1.msra.mxu0 0.0
        %453 = vmatprep.subr.mxu0 0.0
        %454 = vmatpush1.msra.mxu0 0.0
        %455 = vmatprep.subr.mxu0 0.0
        %456 = vmatpush1.msra.mxu0 0.0
        %457 = vmatprep.subr.mxu0 0.0
        %458 = vmatpush1.msra.mxu0 0.0
        %459 = vmatprep.subr.mxu0 0.0
        %460 = vmatpush1.msra.mxu0 0.0
        %461 = vmatprep.subr.mxu0 0.0
        %462 = vmatpush1.msra.mxu0 0.0
        %463 = vmatprep.subr.mxu0 0.0
        %464 = vmatpush1.msra.mxu0 0.0
        %465 = vmatprep.subr.mxu0 0.0
        %466 = vmatpush1.msra.mxu0 0.0
        %467 = vmatprep.subr.mxu0 0.0
        %468 = vmatpush1.msra.mxu0 0.0
        %469 = vmatprep.subr.mxu0 0.0
        %470 = vmatpush1.msra.mxu0 0.0
        %471 = vmatprep.subr.mxu0 0.0
        %472 = vmatpush1.msra.mxu0 0.0
        %473 = vmatprep.subr.mxu0 0.0
        %474 = vmatpush1.msra.mxu0 0.0
        %475 = vmatprep.subr.mxu0 0.0
        %476 = vmatpush1.msra.mxu0 0.0
        %477 = vmatprep.subr.mxu0 0.0
        %478 = vmatpush1.msra.mxu0 0.0
        %479 = vmatprep.subr.mxu0 0.0
        %480 = vmatpush1.msra.mxu0 0.0
        %481 = vmatprep.subr.mxu0 0.0
        %482 = vmatpush1.msra.mxu0 0.0
        %483 = vmatprep.subr.mxu0 0.0
        %484 = vmatpush1.msra.mxu0 0.0
        %485 = vmatprep.subr.mxu0 0.0
        %486 = vmatpush1.msra.mxu0 0.0
        %487 = vmatprep.subr.mxu0 0.0
        %488 = vmatpush1.msra.mxu0 0.0
        %489 = vmatprep.subr.mxu0 0.0
        %490 = vmatpush1.msra.mxu0 0.0
        %491 = vmatprep.subr.mxu0 0.0
        %492 = vmatpush1.msra.mxu0 0.0
        %493 = vmatprep.subr.mxu0 0.0
        %494 = vmatpush1.msra.mxu0 0.0
        %495 = vmatprep.subr.mxu0 0.0
        %496 = vmatpush1.msra.mxu0 0.0
        %497 = vmatprep.mubr.f32.mxu0 0.0
        %v498 = vand.u32 %v269, 4294901760
        %v499 = vsub.f32 %v269, %v498
        %500 = vmatmul.mubr.f32.gmra.mrb[0].mxu0 %v499
        %v501 = vpop.f32.mrb[0].mxu0
        %v502 = vadd.f32 %v426, %v501
        %v503 = vpop.f32.mrb[0].mxu0
        %504 = vdwg.mxu0
        %505 = vmatprep.subr.mxu0 0.0
        %v506 = vand.u32 %v258, 4294901760
        %507 = vmatpush1.msra.mxu0 %v506
        %508 = vmatprep.subr.mxu0 0.0
        %v509 = vand.u32 %v259, 4294901760
        %510 = vmatpush1.msra.mxu0 %v509
        %511 = vmatprep.subr.mxu0 0.0
        %512 = vmatpush1.msra.mxu0 0.0
        %513 = vmatprep.subr.mxu0 0.0
        %514 = vmatpush1.msra.mxu0 0.0
        %515 = vmatprep.subr.mxu0 0.0
        %516 = vmatpush1.msra.mxu0 0.0
        %517 = vmatprep.subr.mxu0 0.0
        %518 = vmatpush1.msra.mxu0 0.0
        %519 = vmatprep.subr.mxu0 0.0
        %520 = vmatpush1.msra.mxu0 0.0
        %521 = vmatprep.subr.mxu0 0.0
        %522 = vmatpush1.msra.mxu0 0.0
        %523 = vmatprep.subr.mxu0 0.0
        %524 = vmatpush1.msra.mxu0 0.0
        %525 = vmatprep.subr.mxu0 0.0
        %526 = vmatpush1.msra.mxu0 0.0
        %527 = vmatprep.subr.mxu0 0.0
        %528 = vmatpush1.msra.mxu0 0.0
        %529 = vmatprep.subr.mxu0 0.0
        %530 = vmatpush1.msra.mxu0 0.0
        %531 = vmatprep.subr.mxu0 0.0
        %532 = vmatpush1.msra.mxu0 0.0
        %533 = vmatprep.subr.mxu0 0.0
        %534 = vmatpush1.msra.mxu0 0.0
        %535 = vmatprep.subr.mxu0 0.0
        %536 = vmatpush1.msra.mxu0 0.0
        %537 = vmatprep.subr.mxu0 0.0
        %538 = vmatpush1.msra.mxu0 0.0
        %539 = vmatprep.subr.mxu0 0.0
        %540 = vmatpush1.msra.mxu0 0.0
        %541 = vmatprep.subr.mxu0 0.0
        %542 = vmatpush1.msra.mxu0 0.0
        %543 = vmatprep.subr.mxu0 0.0
        %544 = vmatpush1.msra.mxu0 0.0
        %545 = vmatprep.subr.mxu0 0.0
        %546 = vmatpush1.msra.mxu0 0.0
        %547 = vmatprep.subr.mxu0 0.0
        %548 = vmatpush1.msra.mxu0 0.0
        %549 = vmatprep.subr.mxu0 0.0
        %550 = vmatpush1.msra.mxu0 0.0
        %551 = vmatprep.subr.mxu0 0.0
        %552 = vmatpush1.msra.mxu0 0.0
        %553 = vmatprep.subr.mxu0 0.0
        %554 = vmatpush1.msra.mxu0 0.0
        %555 = vmatprep.subr.mxu0 0.0
        %556 = vmatpush1.msra.mxu0 0.0
        %557 = vmatprep.subr.mxu0 0.0
        %558 = vmatpush1.msra.mxu0 0.0
        %559 = vmatprep.subr.mxu0 0.0
        %560 = vmatpush1.msra.mxu0 0.0
        %561 = vmatprep.subr.mxu0 0.0
        %562 = vmatpush1.msra.mxu0 0.0
        %563 = vmatprep.subr.mxu0 0.0
        %564 = vmatpush1.msra.mxu0 0.0
        %565 = vmatprep.subr.mxu0 0.0
        %566 = vmatpush1.msra.mxu0 0.0
        %567 = vmatprep.subr.mxu0 0.0
        %568 = vmatpush1.msra.mxu0 0.0
        %569 = vmatprep.subr.mxu0 0.0
        %570 = vmatpush1.msra.mxu0 0.0
        %571 = vmatprep.mubr.f32.mxu0 0.0
        %v572 = vand.u32 %v269, 4294901760
        %v573 = vsub.f32 %v269, %v572
        %v574 = vand.u32 %v573, 4294901760
        %575 = vmatmul.mubr.f32.gmra.mrb[0].mxu0 %v574
        %v576 = vpop.f32.mrb[0].mxu0
        %v577 = vadd.f32 %v502, %v576
        %v578 = vpop.f32.mrb[0].mxu0
        %579 = vdwg.mxu0
        %580 = vmatprep.subr.mxu0 0.0
        %v581 = vand.u32 %v258, 4294901760
        %v582 = vsub.f32 %v258, %v581
        %v583 = vand.u32 %v582, 4294901760
        %584 = vmatpush1.msra.mxu0 %v583
        %585 = vmatprep.subr.mxu0 0.0
        %v586 = vand.u32 %v259, 4294901760
        %v587 = vsub.f32 %v259, %v586
        %v588 = vand.u32 %v587, 4294901760
        %589 = vmatpush1.msra.mxu0 %v588
        %590 = vmatprep.subr.mxu0 0.0
        %591 = vmatpush1.msra.mxu0 0.0
        %592 = vmatprep.subr.mxu0 0.0
        %593 = vmatpush1.msra.mxu0 0.0
        %594 = vmatprep.subr.mxu0 0.0
        %595 = vmatpush1.msra.mxu0 0.0
        %596 = vmatprep.subr.mxu0 0.0
        %597 = vmatpush1.msra.mxu0 0.0
        %598 = vmatprep.subr.mxu0 0.0
        %599 = vmatpush1.msra.mxu0 0.0
        %600 = vmatprep.subr.mxu0 0.0
        %601 = vmatpush1.msra.mxu0 0.0
        %602 = vmatprep.subr.mxu0 0.0
        %603 = vmatpush1.msra.mxu0 0.0
        %604 = vmatprep.subr.mxu0 0.0
        %605 = vmatpush1.msra.mxu0 0.0
        %606 = vmatprep.subr.mxu0 0.0
        %607 = vmatpush1.msra.mxu0 0.0
        %608 = vmatprep.subr.mxu0 0.0
        %609 = vmatpush1.msra.mxu0 0.0
        %610 = vmatprep.subr.mxu0 0.0
        %611 = vmatpush1.msra.mxu0 0.0
        %612 = vmatprep.subr.mxu0 0.0
        %613 = vmatpush1.msra.mxu0 0.0
        %614 = vmatprep.subr.mxu0 0.0
        %615 = vmatpush1.msra.mxu0 0.0
        %616 = vmatprep.subr.mxu0 0.0
        %617 = vmatpush1.msra.mxu0 0.0
        %618 = vmatprep.subr.mxu0 0.0
        %619 = vmatpush1.msra.mxu0 0.0
        %620 = vmatprep.subr.mxu0 0.0
        %621 = vmatpush1.msra.mxu0 0.0
        %622 = vmatprep.subr.mxu0 0.0
        %623 = vmatpush1.msra.mxu0 0.0
        %624 = vmatprep.subr.mxu0 0.0
        %625 = vmatpush1.msra.mxu0 0.0
        %626 = vmatprep.subr.mxu0 0.0
        %627 = vmatpush1.msra.mxu0 0.0
        %628 = vmatprep.subr.mxu0 0.0
        %629 = vmatpush1.msra.mxu0 0.0
        %630 = vmatprep.subr.mxu0 0.0
        %631 = vmatpush1.msra.mxu0 0.0
        %632 = vmatprep.subr.mxu0 0.0
        %633 = vmatpush1.msra.mxu0 0.0
        %634 = vmatprep.subr.mxu0 0.0
        %635 = vmatpush1.msra.mxu0 0.0
        %636 = vmatprep.subr.mxu0 0.0
        %637 = vmatpush1.msra.mxu0 0.0
        %638 = vmatprep.subr.mxu0 0.0
        %639 = vmatpush1.msra.mxu0 0.0
        %640 = vmatprep.subr.mxu0 0.0
        %641 = vmatpush1.msra.mxu0 0.0
        %642 = vmatprep.subr.mxu0 0.0
        %643 = vmatpush1.msra.mxu0 0.0
        %644 = vmatprep.subr.mxu0 0.0
        %645 = vmatpush1.msra.mxu0 0.0
        %646 = vmatprep.subr.mxu0 0.0
        %647 = vmatpush1.msra.mxu0 0.0
        %648 = vmatprep.subr.mxu0 0.0
        %649 = vmatpush1.msra.mxu0 0.0
        %650 = vmatprep.mubr.f32.mxu0 0.0
        %v651 = vand.u32 %v269, 4294901760
        %652 = vmatmul.mubr.f32.gmra.mrb[0].mxu0 %v651
        %v653 = vpop.f32.mrb[0].mxu0
        %v654 = vadd.f32 %v577, %v653
        %v655 = vpop.f32.mrb[0].mxu0
        %656 = vdwg.mxu0
        %657 = vmatprep.subr.mxu0 0.0
        %v658 = vand.u32 %v258, 4294901760
        %659 = vmatpush1.msra.mxu0 %v658
        %660 = vmatprep.subr.mxu0 0.0
        %v661 = vand.u32 %v259, 4294901760
        %662 = vmatpush1.msra.mxu0 %v661
        %663 = vmatprep.subr.mxu0 0.0
        %664 = vmatpush1.msra.mxu0 0.0
        %665 = vmatprep.subr.mxu0 0.0
        %666 = vmatpush1.msra.mxu0 0.0
        %667 = vmatprep.subr.mxu0 0.0
        %668 = vmatpush1.msra.mxu0 0.0
        %669 = vmatprep.subr.mxu0 0.0
        %670 = vmatpush1.msra.mxu0 0.0
        %671 = vmatprep.subr.mxu0 0.0
        %672 = vmatpush1.msra.mxu0 0.0
        %673 = vmatprep.subr.mxu0 0.0
        %674 = vmatpush1.msra.mxu0 0.0
        %675 = vmatprep.subr.mxu0 0.0
        %676 = vmatpush1.msra.mxu0 0.0
        %677 = vmatprep.subr.mxu0 0.0
        %678 = vmatpush1.msra.mxu0 0.0
        %679 = vmatprep.subr.mxu0 0.0
        %680 = vmatpush1.msra.mxu0 0.0
        %681 = vmatprep.subr.mxu0 0.0
        %682 = vmatpush1.msra.mxu0 0.0
        %683 = vmatprep.subr.mxu0 0.0
        %684 = vmatpush1.msra.mxu0 0.0
        %685 = vmatprep.subr.mxu0 0.0
        %686 = vmatpush1.msra.mxu0 0.0
        %687 = vmatprep.subr.mxu0 0.0
        %688 = vmatpush1.msra.mxu0 0.0
        %689 = vmatprep.subr.mxu0 0.0
        %690 = vmatpush1.msra.mxu0 0.0
        %691 = vmatprep.subr.mxu0 0.0
        %692 = vmatpush1.msra.mxu0 0.0
        %693 = vmatprep.subr.mxu0 0.0
        %694 = vmatpush1.msra.mxu0 0.0
        %695 = vmatprep.subr.mxu0 0.0
        %696 = vmatpush1.msra.mxu0 0.0
        %697 = vmatprep.subr.mxu0 0.0
        %698 = vmatpush1.msra.mxu0 0.0
        %699 = vmatprep.subr.mxu0 0.0
        %700 = vmatpush1.msra.mxu0 0.0
        %701 = vmatprep.subr.mxu0 0.0
        %702 = vmatpush1.msra.mxu0 0.0
        %703 = vmatprep.subr.mxu0 0.0
        %704 = vmatpush1.msra.mxu0 0.0
        %705 = vmatprep.subr.mxu0 0.0
        %706 = vmatpush1.msra.mxu0 0.0
        %707 = vmatprep.subr.mxu0 0.0
        %708 = vmatpush1.msra.mxu0 0.0
        %709 = vmatprep.subr.mxu0 0.0
        %710 = vmatpush1.msra.mxu0 0.0
        %711 = vmatprep.subr.mxu0 0.0
        %712 = vmatpush1.msra.mxu0 0.0
        %713 = vmatprep.subr.mxu0 0.0
        %714 = vmatpush1.msra.mxu0 0.0
        %715 = vmatprep.subr.mxu0 0.0
        %716 = vmatpush1.msra.mxu0 0.0
        %717 = vmatprep.subr.mxu0 0.0
        %718 = vmatpush1.msra.mxu0 0.0
        %719 = vmatprep.subr.mxu0 0.0
        %720 = vmatpush1.msra.mxu0 0.0
        %721 = vmatprep.subr.mxu0 0.0
        %722 = vmatpush1.msra.mxu0 0.0
        %723 = vmatprep.mubr.f32.mxu0 0.0
        %v724 = vand.u32 %v269, 4294901760
        %725 = vmatmul.mubr.f32.gmra.mrb[0].mxu0 %v724
        %v726 = vpop.f32.mrb[0].mxu0
        %v727 = vadd.f32 %v654, %v726
        %v728 = vpop.f32.mrb[0].mxu0
        %729 = vdwg.mxu0
        %vm730 = vcmask 261120
        %731 = vst.msk [vmem:[%s253] sm:$0xff] %vm730, %v727
        %s732 = sand.u32 %s125, 1
        %s733 = scalar_lea.sflag [#allocation4], %s732
        %s734 = sand.u32 %s125, 1
        %s735 = smul.addr %s734, 8
        %s736 = scalar_lea.vmem [#allocation7], %s735
        // Predicated region
        $region41: #{tpu_custom_call.1} parent=31 // pred_check
          %p737 = pneg %p135
        $region42: #{tpu_custom_call.1} parent=31 // pred_check_branch
          %739 = sbr.rel (%p737) target = $region44
        $region43: #{tpu_custom_call.1} parent=31 // pred_region
          %s741 = ssub.s32 128, 128
          %742 = vsyncadd %s733, %s741
          %s743 = sadd.s32 %s28, %s27
          %s744 = smul.addr %s743, 128
          %s745 = scalar_lea.hbm %s3, %s744
          %s747 = sshll.u32 %s736, 4
          %s748 = int_to_ptr.vmem [resolvable:$true] %s747
          %750 = dma.vmem_to_hbm [thread:$0]  %s748, 128, %s745, %s733
        $region44: #{tpu_custom_call.1} parent=31 // pred_fallthru
          _
      $region32: #{tpu_custom_call.1} parent=5 // pred_fallthru
        _
      %p751 = scmp.le.s32.totalorder 2, %s18
      // Predicated region
      $region45: #{tpu_custom_call.1} parent=5 // pred_check
        %p752 = pneg %p751
      $region46: #{tpu_custom_call.1} parent=5 // pred_check_branch
        %754 = sbr.rel (%p752) target = $region48
      $region47: #{tpu_custom_call.1} parent=5 // pred_region
        %s755 = ssub.s32 %s18, 2
        // Predicated region
        $region49: #{tpu_custom_call.1} parent=47 // pred_check
          %p756 = pneg %p141
        $region50: #{tpu_custom_call.1} parent=47 // pred_check_branch
          %758 = sbr.rel (%p756) target = $region52
        $region51: #{tpu_custom_call.1} parent=47 // pred_region
          %s759 = sand.u32 %s126, 1
          %s760 = scalar_lea.sflag [#allocation4], %s759
          %s761 = sand.u32 %s126, 1
          %s762 = smul.addr %s761, 8
          %s763 = scalar_lea.vmem [#allocation7], %s762
          %764 = dma.done %s760, 128
        $region52: #{tpu_custom_call.1} parent=47 // pred_fallthru
          _
      $region48: #{tpu_custom_call.1} parent=5 // pred_fallthru
        _
    $region6: #{tpu_custom_call.1} parent=1 // loop_footer
      %s22 = sadd.s32 1, %s18
    $region7: #{tpu_custom_call.1} parent=1 // loop_footer_branch
      %17 = sbr.rel target = $region3
    $region8: #{tpu_custom_call.1} parent=1 // loop_exit
      _
    %765 = vsyncpa [#allocation3], 1
    %s766 = scalar_lea.sflag [#allocation3], 1
    %767 = vsyncpa %s766, 1
    %768 = vsyncpa [#allocation6], 1
    %s769 = scalar_lea.sflag [#allocation6], 1
    %770 = vsyncpa %s769, 1
    %771 = vsyncpa [#allocation4], 1
    %s772 = scalar_lea.sflag [#allocation4], 1
    %773 = vsyncpa %s772, 1

</llo_original>
